<compile_context>
chip_gen: v5e
topology: v5e:2x2
jax: 0.10.0
libtpu: 0.0.40
codegen_flags: <defaults>
</compile_context>

<pallas_src>
import functools

import jax
import jax.numpy as jnp
from jax import lax
from jax.experimental import pallas as pl
from jax.experimental.pallas import tpu as pltpu


def _cdiv(a, b):
    return -(-a // b)


def _round_up(n, m):
    return ((n + m - 1) // m) * m


def _kernel_activation(name):
    if name == "relu":
        return lambda h: jnp.maximum(h, 0.0)
    if name == "tanh":
        return jnp.tanh
    if name == "sigmoid":
        # One EUP op (tanh) instead of exp + divide on the single EUP slot.
        return lambda h: 0.5 * (jnp.tanh(0.5 * h) + 1.0)
    return lambda h: jnp.maximum(h, 0.0)  # default, same as the PyTorch module


def _supports_bf16_vpu():
    """bf16 VPU/EUP exists on v6e / v7x, not on v5e (or older)."""
    try:
        kind = jax.devices()[0].device_kind.lower()
    except Exception:
        return False
    return ("v6" in kind) or ("v7" in kind) or ("7x" in kind)


def _mlp_kernel(*refs, num_interior, activation, compute_dtype, act_dtype,
                max_unrolled_layers):
    """Feature-major MLP forward on one batch tile.

    refs = (x, w0, b0[, wh, bh], wl, bl, out)
      x   : (1, TB) f32            batch tile, lane-dense
      w0  : (H, 1)  b0: (H, 1)     first Linear(1, H), f32
      wh  : (L-1, H, H)            stacked interior weights (out, in), compute_dtype
      bh  : (L-1, H, 1)            stacked interior biases, f32
      wl  : (H, 1)  bl: (1, 1)     last Linear(H, 1), f32
      out : (1, TB) f32            lane-dense output tile
    """
    if num_interior > 0:
        x_ref, w0_ref, b0_ref, wh_ref, bh_ref, wl_ref, bl_ref, out_ref = refs
    else:
        x_ref, w0_ref, b0_ref, wl_ref, bl_ref, out_ref = refs
        wh_ref = bh_ref = None
    act = _kernel_activation(activation)

    # First layer Linear(1, H): pure VPU broadcast (H,1)*(1,TB) + (H,1).
    x = x_ref[...]                                              # (1, TB) f32
    h = act((w0_ref[...] * x + b0_ref[...]).astype(act_dtype))  # (H, TB)

    # Interior Linear(H, H): MXU.  Operands in compute_dtype (bf16 => single
    # MXU pass; f32 => Mosaic native multi-pass), accumulation always f32.
    def layer(w, b, h_in):
        z = jnp.dot(w, h_in.astype(compute_dtype),
                    preferred_element_type=jnp.float32) + b      # (H, TB) f32
        return act(z.astype(act_dtype))

    if num_interior <= max_unrolled_layers:
        for l in range(num_interior):                # small: fully unrolled
            h = layer(wh_ref[l], bh_ref[l], h)
    elif num_interior > 0:                           # deep: bounded code size
        h = lax.fori_loop(0, num_interior,
                          lambda l, hh: layer(wh_ref[l], bh_ref[l], hh), h)

    # Last layer Linear(H, 1): VPU multiply + sublane (XLU) reduce -> (1, TB).
    y = (jnp.sum(h.astype(jnp.float32) * wl_ref[...], axis=0, keepdims=True)
         + bl_ref[...])
    out_ref[...] = y.astype(out_ref.dtype)


def mlp_forward(x, params, activation="relu", *, block_b=None,
                compute_dtype=jnp.bfloat16, max_unrolled_layers=8):
    """x: (B, 1) float32. params: list of (W, b) in PyTorch layout
    (W: (out_features, in_features), b: (out_features,)).

    compute_dtype=bfloat16 (default): fast path, bf16 MXU inputs / f32 accum.
    compute_dtype=float32: parity path (native f32 matmul, f32 activations).
    """
    B = x.shape[0]
    num_linear = len(params)
    assert num_linear >= 2, "need at least Linear(1,H) and Linear(H,1)"
    H = params[0][0].shape[0]
    num_interior = num_linear - 2

    compute_dtype = jnp.dtype(compute_dtype)
    use_bf16 = compute_dtype == jnp.dtype(jnp.bfloat16)
    # bf16 activations only where VPU/EUP are natively bf16 (v6e/v7x).
    act_dtype = jnp.bfloat16 if (use_bf16 and _supports_bf16_vpu()) else jnp.float32

    if block_b is None:
        # bf16 h halves the live-vreg footprint -> bigger tiles are safe.
        block_b = 2048 if use_bf16 else 1024

    # --- pack parameters into the kernel's feature-major layout -------------
    w0 = params[0][0].reshape(H, 1).astype(jnp.float32)
    b0 = params[0][1].reshape(H, 1).astype(jnp.float32)
    wl = params[-1][0].reshape(1, H).T.astype(jnp.float32)       # (H, 1)
    bl = params[-1][1].reshape(1, 1).astype(jnp.float32)
    if num_interior > 0:
        wh = jnp.stack([params[1 + l][0] for l in range(num_interior)]
                       ).astype(compute_dtype)                   # (L-1, H, H)
        bh = jnp.stack([params[1 + l][1].reshape(H, 1)
                        for l in range(num_interior)]).astype(jnp.float32)

    # --- adaptive lane-dense batch tiling ------------------------------------
    # >=2 tiles for large B (feeds both v7x TensorCores; ~neutral elsewhere),
    # TB chosen to minimize tail padding, always a multiple of 128.
    min_tiles = 2 if B > 256 else 1
    num_tiles = max(_cdiv(B, block_b), min_tiles)
    TB = _round_up(_cdiv(B, num_tiles), 128)
    B_pad = num_tiles * TB

    x_lane = jnp.zeros((1, B_pad), jnp.float32).at[0, :B].set(
        x[:, 0].astype(jnp.float32))

    def resident(arr):
        # Full-array block, same block every grid step -> stays in VMEM.
        shape = arr.shape
        return pl.BlockSpec(shape, lambda i: (0,) * len(shape))

    in_specs = [pl.BlockSpec((1, TB), lambda i: (0, i)),   # x tile (pipelined)
                resident(w0), resident(b0)]
    args = [x_lane, w0, b0]
    if num_interior > 0:
        in_specs += [resident(wh), resident(bh)]
        args += [wh, bh]
    in_specs += [resident(wl), resident(bl)]
    args += [wl, bl]

    kernel = functools.partial(
        _mlp_kernel, num_interior=num_interior, activation=activation,
        compute_dtype=compute_dtype, act_dtype=act_dtype,
        max_unrolled_layers=max_unrolled_layers)

    # Rough VMEM budget: pipelined x/out tiles (double-buffered) + resident
    # params (double-buffered by default) + live activations.  Only override
    # the default scoped limit when the estimate actually needs it.
    param_bytes = sum(int(a.size) * a.dtype.itemsize for a in args[1:])
    est_bytes = (2 * 2 * 2 * TB * 4        # x + out tiles, 2 buffers each
                 + 2 * param_bytes         # resident params, 2 buffers
                 + 8 * H * TB * 4          # h / z working set (generous)
                 + (1 << 20))
    compiler_kwargs = dict(dimension_semantics=("parallel",))
    if est_bytes > (16 << 20):
        compiler_kwargs["vmem_limit_bytes"] = int(est_bytes)

    out = pl.pallas_call(
        kernel,
        out_shape=jax.ShapeDtypeStruct((1, B_pad), jnp.float32),
        grid=(num_tiles,),
        in_specs=in_specs,
        out_specs=pl.BlockSpec((1, TB), lambda i: (0, i)),
        compiler_params=pltpu.CompilerParams(**compiler_kwargs),
    )(*args)

    return out[0, :B].reshape(B, 1)


def init_params(key, hidden_layers, neurons_per_layer):
    """PyTorch-style nn.Linear init: U(-k, k), k = 1/sqrt(fan_in).
    Weights kept in PyTorch layout (out_features, in_features)."""
    dims = [1] + [neurons_per_layer] * hidden_layers + [1]
    params = []
    for i in range(len(dims) - 1):
        fan_in, fan_out = dims[i], dims[i + 1]
        k = 1.0 / jnp.sqrt(jnp.float32(fan_in))
        key, kw, kb = jax.random.split(key, 3)
        w = jax.random.uniform(kw, (fan_out, fan_in), jnp.float32, -k, k)
        b = jax.random.uniform(kb, (fan_out,), jnp.float32, -k, k)
        params.append((w, b))
    return params


def reference_forward(x, params, activation="relu"):
    """Plain-JAX f32 reference (matches PyTorch: y = x @ W.T + b)."""
    act = {"relu": lambda h: jnp.maximum(h, 0.0),
           "tanh": jnp.tanh,
           "sigmoid": jax.nn.sigmoid}.get(activation, lambda h: jnp.maximum(h, 0.0))
    h = x.astype(jnp.float32)
    for i, (w, b) in enumerate(params):
        h = jnp.dot(h, w.T, precision=jax.lax.Precision.HIGHEST) + b
        if i < len(params) - 1:
            h = act(h)
    return h


if __name__ == "__main__":
    key = jax.random.PRNGKey(0)

    # Config consistent with the module: hidden_layers=3, H=32.
    hidden_layers, H = 3, 32
    key, kp = jax.random.split(key)
    params = init_params(kp, hidden_layers, H)

    # 1) f32 parity path, relu, tiny batch (single tile): tight check.
    key, kx = jax.random.split(key)
    x_small = jax.random.normal(kx, (8, 1), jnp.float32)
    out1 = jax.block_until_ready(
        mlp_forward(x_small, params, "relu", compute_dtype=jnp.float32))
    ref1 = reference_forward(x_small, params, "relu")
    assert out1.shape == (8, 1)
    assert jnp.allclose(out1, ref1, atol=1e-5, rtol=1e-4), \
        float(jnp.max(jnp.abs(out1 - ref1)))

    # 2) f32 parity path, tanh, B=600 -> 2 tiles of TB=384 (adaptive tiling).
    key, kx2 = jax.random.split(key)
    x_big = jax.random.normal(kx2, (600, 1), jnp.float32)
    out2 = jax.block_until_ready(
        mlp_forward(x_big, params, "tanh", compute_dtype=jnp.float32))
    ref2 = reference_forward(x_big, params, "tanh")
    assert out2.shape == (600, 1)
    assert jnp.allclose(out2, ref2, atol=1e-5, rtol=1e-4), \
        float(jnp.max(jnp.abs(out2 - ref2)))

    # 3) default fast path (bf16 MXU inputs, f32 accumulate), tanh, B=600.
    out3 = jax.block_until_ready(mlp_forward(x_big, params, "tanh"))
    assert out3.shape == (600, 1)
    assert jnp.allclose(out3, ref2, atol=5e-2, rtol=5e-2), \
        float(jnp.max(jnp.abs(out3 - ref2)))

    # 4) deep stack (num_interior=9 > 8) exercises the fori_loop path, sigmoid.
    key, kp2, kx3 = jax.random.split(key, 3)
    params_deep = init_params(kp2, 10, H)
    x_mid = jax.random.normal(kx3, (300, 1), jnp.float32)
    out4 = jax.block_until_ready(
        mlp_forward(x_mid, params_deep, "sigmoid", compute_dtype=jnp.float32))
    ref4 = reference_forward(x_mid, params_deep, "sigmoid")
    assert out4.shape == (300, 1)
    assert jnp.allclose(out4, ref4, atol=1e-4, rtol=1e-3), \
        float(jnp.max(jnp.abs(out4 - ref4)))

    print("KERNEL_OK")
</pallas_src>

<mosaic_0001>
module attributes {stable_mosaic.version = 11 : i64} {
  func.func @_mlp_kernel(%arg0: i32, %arg1: memref<1x128xf32, #tpu.memory_space<vmem>>, %arg2: memref<32x1xf32, #tpu.memory_space<vmem>>, %arg3: memref<32x1xf32, #tpu.memory_space<vmem>>, %arg4: memref<2x32x32xf32, #tpu.memory_space<vmem>>, %arg5: memref<2x32x1xf32, #tpu.memory_space<vmem>>, %arg6: memref<32x1xf32, #tpu.memory_space<vmem>>, %arg7: memref<1x1xf32, #tpu.memory_space<vmem>>, %arg8: memref<1x128xf32, #tpu.memory_space<vmem>>) attributes {dimension_semantics = [#tpu.dimension_semantics<parallel>], iteration_bounds = array<i64: 1>, scalar_prefetch = 0 : i64, scratch_operands = 0 : i64, tpu.core_type = #tpu.core_type<tc>, window_params = [{transform_indices = @transform_0, window_bounds = array<i64: 1, 128>}, {pipeline_mode = #tpu.pipeline_mode<synchronous>, transform_indices = @transform_1, window_bounds = array<i64: 32, 1>}, {pipeline_mode = #tpu.pipeline_mode<synchronous>, transform_indices = @transform_2, window_bounds = array<i64: 32, 1>}, {pipeline_mode = #tpu.pipeline_mode<synchronous>, transform_indices = @transform_3, window_bounds = array<i64: 2, 32, 32>}, {pipeline_mode = #tpu.pipeline_mode<synchronous>, transform_indices = @transform_4, window_bounds = array<i64: 2, 32, 1>}, {pipeline_mode = #tpu.pipeline_mode<synchronous>, transform_indices = @transform_5, window_bounds = array<i64: 32, 1>}, {pipeline_mode = #tpu.pipeline_mode<synchronous>, transform_indices = @transform_6, window_bounds = array<i64: 1, 1>}, {transform_indices = @transform_7, window_bounds = array<i64: 1, 128>}]} {
    %c0 = arith.constant 0 : index
    %c0_0 = arith.constant 0 : index
    %0 = vector.load %arg1[%c0, %c0_0] : memref<1x128xf32, #tpu.memory_space<vmem>>, vector<1x128xf32>
    %c0_1 = arith.constant 0 : index
    %c0_2 = arith.constant 0 : index
    %1 = vector.load %arg2[%c0_1, %c0_2] : memref<32x1xf32, #tpu.memory_space<vmem>>, vector<32x1xf32>
    %2 = vector.broadcast %1 : vector<32x1xf32> to vector<32x128xf32>
    %3 = vector.broadcast %0 : vector<1x128xf32> to vector<32x128xf32>
    %4 = arith.mulf %2, %3 : vector<32x128xf32>
    %c0_3 = arith.constant 0 : index
    %c0_4 = arith.constant 0 : index
    %5 = vector.load %arg3[%c0_3, %c0_4] : memref<32x1xf32, #tpu.memory_space<vmem>>, vector<32x1xf32>
    %6 = vector.broadcast %5 : vector<32x1xf32> to vector<32x128xf32>
    %7 = arith.addf %4, %6 : vector<32x128xf32>
    %cst = arith.constant 0.000000e+00 : f32
    %8 = vector.broadcast %cst : f32 to vector<32x128xf32>
    %9 = arith.maximumf %7, %8 : vector<32x128xf32>
    %c0_5 = arith.constant 0 : index
    %c0_6 = arith.constant 0 : index
    %c0_7 = arith.constant 0 : index
    %10 = vector.load %arg4[%c0_5, %c0_6, %c0_7] : memref<2x32x32xf32, #tpu.memory_space<vmem>>, vector<1x32x32xf32>
    %11 = vector.shape_cast %10 : vector<1x32x32xf32> to vector<32x32xf32>
    %c0_8 = arith.constant 0 : index
    %c0_9 = arith.constant 0 : index
    %c0_10 = arith.constant 0 : index
    %12 = vector.load %arg5[%c0_8, %c0_9, %c0_10] : memref<2x32x1xf32, #tpu.memory_space<vmem>>, vector<1x32x1xf32>
    %13 = vector.shape_cast %12 : vector<1x32x1xf32> to vector<32x1xf32>
    %cst_11 = arith.constant dense<0.000000e+00> : vector<32x128xf32>
    %14 = tpu.matmul %11, %9, %cst_11 {dimension_numbers = #tpu.dot_dimension_numbers<[1], [0], [0], [1], [0, 0, 1, 1], [], []>} : vector<32x32xf32>, vector<32x128xf32>, vector<32x128xf32> -> vector<32x128xf32>
    %15 = vector.broadcast %13 : vector<32x1xf32> to vector<32x128xf32>
    %16 = arith.addf %14, %15 : vector<32x128xf32>
    %cst_12 = arith.constant 0.000000e+00 : f32
    %17 = vector.broadcast %cst_12 : f32 to vector<32x128xf32>
    %18 = arith.maximumf %16, %17 : vector<32x128xf32>
    %c1 = arith.constant 1 : index
    %c0_13 = arith.constant 0 : index
    %c0_14 = arith.constant 0 : index
    %19 = vector.load %arg4[%c1, %c0_13, %c0_14] : memref<2x32x32xf32, #tpu.memory_space<vmem>>, vector<1x32x32xf32>
    %20 = vector.shape_cast %19 : vector<1x32x32xf32> to vector<32x32xf32>
    %c1_15 = arith.constant 1 : index
    %c0_16 = arith.constant 0 : index
    %c0_17 = arith.constant 0 : index
    %21 = vector.load %arg5[%c1_15, %c0_16, %c0_17] : memref<2x32x1xf32, #tpu.memory_space<vmem>>, vector<1x32x1xf32>
    %22 = vector.shape_cast %21 : vector<1x32x1xf32> to vector<32x1xf32>
    %cst_18 = arith.constant dense<0.000000e+00> : vector<32x128xf32>
    %23 = tpu.matmul %20, %18, %cst_18 {dimension_numbers = #tpu.dot_dimension_numbers<[1], [0], [0], [1], [0, 0, 1, 1], [], []>} : vector<32x32xf32>, vector<32x128xf32>, vector<32x128xf32> -> vector<32x128xf32>
    %24 = vector.broadcast %22 : vector<32x1xf32> to vector<32x128xf32>
    %25 = arith.addf %23, %24 : vector<32x128xf32>
    %cst_19 = arith.constant 0.000000e+00 : f32
    %26 = vector.broadcast %cst_19 : f32 to vector<32x128xf32>
    %27 = arith.maximumf %25, %26 : vector<32x128xf32>
    %c0_20 = arith.constant 0 : index
    %c0_21 = arith.constant 0 : index
    %28 = vector.load %arg6[%c0_20, %c0_21] : memref<32x1xf32, #tpu.memory_space<vmem>>, vector<32x1xf32>
    %29 = vector.broadcast %28 : vector<32x1xf32> to vector<32x128xf32>
    %30 = arith.mulf %27, %29 : vector<32x128xf32>
    %cst_22 = arith.constant dense<0.000000e+00> : vector<128xf32>
    %31 = vector.multi_reduction <add>, %30, %cst_22 [0] : vector<32x128xf32> to vector<128xf32>
    %32 = vector.shape_cast %31 : vector<128xf32> to vector<1x128xf32>
    %c0_23 = arith.constant 0 : index
    %c0_24 = arith.constant 0 : index
    %33 = vector.load %arg7[%c0_23, %c0_24] : memref<1x1xf32, #tpu.memory_space<vmem>>, vector<1x1xf32>
    %34 = vector.broadcast %33 : vector<1x1xf32> to vector<1x128xf32>
    %35 = arith.addf %32, %34 : vector<1x128xf32>
    %c0_25 = arith.constant 0 : index
    %c0_26 = arith.constant 0 : index
    %36 = vector.load %arg8[%c0_25, %c0_26] : memref<1x128xf32, #tpu.memory_space<vmem>>, vector<1x128xf32>
    tpu.vector_store %arg8[%c0_25, %c0_26], %35 {strides = array<i32>} : memref<1x128xf32, #tpu.memory_space<vmem>>, vector<1x128xf32>,
    return
  }
  func.func @transform_0(%arg0: i32) -> (i32, i32) {
    %c0_i32 = arith.constant 0 : i32
    %c0_i32_0 = arith.constant 0 : i32
    return %c0_i32, %arg0 : i32, i32
  }
  func.func @transform_1(%arg0: i32) -> (i32, i32) {
    %c0_i32 = arith.constant 0 : i32
    %c0_i32_0 = arith.constant 0 : i32
    %c0_i32_1 = arith.constant 0 : i32
    return %c0_i32, %c0_i32_0 : i32, i32
  }
  func.func @transform_2(%arg0: i32) -> (i32, i32) {
    %c0_i32 = arith.constant 0 : i32
    %c0_i32_0 = arith.constant 0 : i32
    %c0_i32_1 = arith.constant 0 : i32
    return %c0_i32, %c0_i32_0 : i32, i32
  }
  func.func @transform_3(%arg0: i32) -> (i32, i32, i32) {
    %c0_i32 = arith.constant 0 : i32
    %c0_i32_0 = arith.constant 0 : i32
    %c0_i32_1 = arith.constant 0 : i32
    %c0_i32_2 = arith.constant 0 : i32
    return %c0_i32, %c0_i32_0, %c0_i32_1 : i32, i32, i32
  }
  func.func @transform_4(%arg0: i32) -> (i32, i32, i32) {
    %c0_i32 = arith.constant 0 : i32
    %c0_i32_0 = arith.constant 0 : i32
    %c0_i32_1 = arith.constant 0 : i32
    %c0_i32_2 = arith.constant 0 : i32
    return %c0_i32, %c0_i32_0, %c0_i32_1 : i32, i32, i32
  }
  func.func @transform_5(%arg0: i32) -> (i32, i32) {
    %c0_i32 = arith.constant 0 : i32
    %c0_i32_0 = arith.constant 0 : i32
    %c0_i32_1 = arith.constant 0 : i32
    return %c0_i32, %c0_i32_0 : i32, i32
  }
  func.func @transform_6(%arg0: i32) -> (i32, i32) {
    %c0_i32 = arith.constant 0 : i32
    %c0_i32_0 = arith.constant 0 : i32
    %c0_i32_1 = arith.constant 0 : i32
    return %c0_i32, %c0_i32_0 : i32, i32
  }
  func.func @transform_7(%arg0: i32) -> (i32, i32) {
    %c0_i32 = arith.constant 0 : i32
    %c0_i32_0 = arith.constant 0 : i32
    return %c0_i32, %arg0 : i32, i32
  }
}

</mosaic_0001>

<llo_original>
// kernel: tpu_custom_call.1
$region0: #{tpu_custom_call.1}
  #allocation0 [shape = 'u32[]', space=smem, size = 0x4, offset = 0x4, fixed_abs, tag = 'smem constant byte address 0x4 - core index']
  #allocation1 [shape = 'u32[72,128]{1,0:T(1,128)}', space=vmem, size = 0x9000, scoped, tag = 'internal scratch']
  #allocation2 [shape = 'f32[1,1]{1,0:T(1,128)S(1)}', space=vmem, size = 0x200, scoped, tag = 'scoped memory for tpu_custom_call.1']
  %s0 = inlined_call_operand.vmem [shape: f32[1,128], index: 0, kind: input, shape index: {}]
  %s1 = inlined_call_operand.vmem [shape: f32[32,1], index: 1, kind: input, shape index: {}]
  %s2 = inlined_call_operand.vmem [shape: f32[32,1], index: 2, kind: input, shape index: {}]
  %s3 = inlined_call_operand.vmem [shape: f32[2,32,32], index: 3, kind: input, shape index: {}]
  %s4 = inlined_call_operand.vmem [shape: f32[2,32,1], index: 4, kind: input, shape index: {}]
  %s5 = inlined_call_operand.vmem [shape: f32[32,1], index: 5, kind: input, shape index: {}]
  %s6 = inlined_call_operand.<no memory space> [shape: f32[1,1], index: 6, kind: input, shape index: {}]
  %s7 = inlined_call_operand.hbm [shape: f32[1,128], index: 7, kind: output, shape index: {}]
  %s8 = sld [smem:[#allocation0]]
  $region38: #{tpu_custom_call.1} parent=0
    _
  %s10 = ssub.s32 1, %s8
  %s11 = scalar_select 0, %s10, %s8
  %v12 = vstv %s6
  %13 = vst [vmem:[#allocation2] sm:$0x1] %v12
  $region1: #{tpu_custom_call.1} parent=0
    #allocation3 [shape = 'u8[512]{0}', space=vmem, size = 0x400, scoped, tag = 'output window, operand 0, single buffered']
    #allocation4 [shape = 's32[1]{0}', space=sflag, size = 0x4, scoped, tag = 'scoped memory for tpu_custom_call.1']
    %14 = vsyncpa [#allocation4], 0
    // Predicated region
    $region2: #{tpu_custom_call.1} parent=1 // pred_check
      _
    $region3: #{tpu_custom_call.1} parent=1 // pred_check_branch
      %16 = sbr.rel (0) target = $region5
    $region4: #{tpu_custom_call.1} parent=1 // pred_region
      _
    $region5: #{tpu_custom_call.1} parent=1 // pred_fallthru
      _
    // Predicated region
    $region6: #{tpu_custom_call.1} parent=1 // pred_check
      _
    $region7: #{tpu_custom_call.1} parent=1 // pred_check_branch
      %18 = sbr.rel (0) target = $region9
    $region8: #{tpu_custom_call.1} parent=1 // pred_region
      _
    $region9: #{tpu_custom_call.1} parent=1 // pred_fallthru
      _
    // Predicated region
    $region10: #{tpu_custom_call.1} parent=1 // pred_check
      _
    $region11: #{tpu_custom_call.1} parent=1 // pred_check_branch
      %20 = sbr.rel (0) target = $region13
    $region12: #{tpu_custom_call.1} parent=1 // pred_region
      _
    $region13: #{tpu_custom_call.1} parent=1 // pred_fallthru
      _
    // Predicated region
    $region14: #{tpu_custom_call.1} parent=1 // pred_check
      _
    $region15: #{tpu_custom_call.1} parent=1 // pred_check_branch
      %22 = sbr.rel (0) target = $region17
    $region16: #{tpu_custom_call.1} parent=1 // pred_region
      _
    $region17: #{tpu_custom_call.1} parent=1 // pred_fallthru
      _
    // Predicated region
    $region18: #{tpu_custom_call.1} parent=1 // pred_check
      _
    $region19: #{tpu_custom_call.1} parent=1 // pred_check_branch
      %24 = sbr.rel (0) target = $region21
    $region20: #{tpu_custom_call.1} parent=1 // pred_region
      _
    $region21: #{tpu_custom_call.1} parent=1 // pred_fallthru
      _
    // Predicated region
    $region22: #{tpu_custom_call.1} parent=1 // pred_check
      _
    $region23: #{tpu_custom_call.1} parent=1 // pred_check_branch
      %26 = sbr.rel (0) target = $region25
    $region24: #{tpu_custom_call.1} parent=1 // pred_region
      _
    $region25: #{tpu_custom_call.1} parent=1 // pred_fallthru
      _
    // Predicated region
    $region26: #{tpu_custom_call.1} parent=1 // pred_check
      _
    $region27: #{tpu_custom_call.1} parent=1 // pred_check_branch
      %28 = sbr.rel (0) target = $region29
    $region28: #{tpu_custom_call.1} parent=1 // pred_region
      _
    $region29: #{tpu_custom_call.1} parent=1 // pred_fallthru
      _
    %v29 = vld [vmem:[%s0] sm:$0x1]
    %v30 = vld [vmem:[%s1] sm:$0xff]
    %v31 = vld [vmem:[%s1 + $0x8] sm:$0xff]
    %v32 = vld [vmem:[%s1 + $0x10] sm:$0xff]
    %v33 = vld [vmem:[%s1 + $0x18] sm:$0xff]
    %35 = vset.pattern.permute.xlu0 0
    %36 = vperm.xlu0 %35, %v30
    %v37 = vpop.permute.xlu0 %36
    %40 = vset.pattern.permute.xlu0 0
    %41 = vperm.xlu0 %40, %v31
    %v42 = vpop.permute.xlu0 %41
    %45 = vset.pattern.permute.xlu0 0
    %46 = vperm.xlu0 %45, %v32
    %v47 = vpop.permute.xlu0 %46
    %50 = vset.pattern.permute.xlu0 0
    %51 = vperm.xlu0 %50, %v33
    %v52 = vpop.permute.xlu0 %51
    %v55 = vperm.slane %v29, 0
    %v57 = vmul.f32 %v37, %v55
    %v58 = vmul.f32 %v42, %v55
    %v59 = vmul.f32 %v47, %v55
    %v60 = vmul.f32 %v52, %v55
    %v61 = vld [vmem:[%s2] sm:$0xff]
    %v62 = vld [vmem:[%s2 + $0x8] sm:$0xff]
    %v63 = vld [vmem:[%s2 + $0x10] sm:$0xff]
    %v64 = vld [vmem:[%s2 + $0x18] sm:$0xff]
    %66 = vset.pattern.permute.xlu0 0
    %67 = vperm.xlu0 %66, %v61
    %v68 = vpop.permute.xlu0 %67
    %71 = vset.pattern.permute.xlu0 0
    %72 = vperm.xlu0 %71, %v62
    %v73 = vpop.permute.xlu0 %72
    %76 = vset.pattern.permute.xlu0 0
    %77 = vperm.xlu0 %76, %v63
    %v78 = vpop.permute.xlu0 %77
    %81 = vset.pattern.permute.xlu0 0
    %82 = vperm.xlu0 %81, %v64
    %v83 = vpop.permute.xlu0 %82
    %v85 = vadd.f32 %v57, %v68
    %v86 = vadd.f32 %v58, %v73
    %v87 = vadd.f32 %v59, %v78
    %v88 = vadd.f32 %v60, %v83
    %v89 = vmax.f32 %v85, 0.0
    %v90 = vmax.f32 %v86, 0.0
    %v91 = vmax.f32 %v87, 0.0
    %v92 = vmax.f32 %v88, 0.0
    %v93 = vld [vmem:[%s3] sm:$0xff]
    %v94 = vld [vmem:[%s3 + $0x8] sm:$0xff]
    %v95 = vld [vmem:[%s3 + $0x10] sm:$0xff]
    %v96 = vld [vmem:[%s3 + $0x18] sm:$0xff]
    %v97 = vld [vmem:[%s4] sm:$0xff]
    %v98 = vld [vmem:[%s4 + $0x8] sm:$0xff]
    %v99 = vld [vmem:[%s4 + $0x10] sm:$0xff]
    %v100 = vld [vmem:[%s4 + $0x18] sm:$0xff]
    %102 = vset.pattern.permute.xlu0 0
    %103 = vperm.xlu0 %102, %v97
    %v104 = vpop.permute.xlu0 %103
    %107 = vset.pattern.permute.xlu0 0
    %108 = vperm.xlu0 %107, %v98
    %v109 = vpop.permute.xlu0 %108
    %112 = vset.pattern.permute.xlu0 0
    %113 = vperm.xlu0 %112, %v99
    %v114 = vpop.permute.xlu0 %113
    %117 = vset.pattern.permute.xlu0 0
    %118 = vperm.xlu0 %117, %v100
    %v119 = vpop.permute.xlu0 %118
    %vm121 = vcmask 261120
    %v123 = vsel %vm121, %v93, 0
    %v126 = vsel %vm121, %v94, 0
    %v129 = vsel %vm121, %v95, 0
    %v132 = vsel %vm121, %v96, 0
    %134 = vmatpush.msra.mxu0 0.0
    %135 = vmatpush.msra.mxu0 0.0
    %136 = vmatpush.msra.mxu0 0.0
    %137 = vmatpush.msra.mxu0 0.0
    %138 = vmatpush.msra.mxu0 0.0
    %139 = vmatpush.msra.mxu0 0.0
    %140 = vmatpush.msra.mxu0 0.0
    %141 = vmatpush.msra.mxu0 0.0
    %142 = vmatpush.msra.mxu0 0.0
    %143 = vmatpush.msra.mxu0 0.0
    %144 = vmatpush.msra.mxu0 0.0
    %145 = vmatpush.msra.mxu0 0.0
    %146 = vmatpush.msra.mxu0 %v92
    %147 = vmatpush.msra.mxu0 %v91
    %148 = vmatpush.msra.mxu0 %v90
    %149 = vmatpush.msra.mxu0 %v89
    %150 = vmatmul.f32.gmra.mxu0 %v123
    %v151 = vpop.f32.mrf.mxu0
    %v152 = vadd.f32 %v104, %v151
    %153 = vmatmul.f32.gmra.mxu0 %v126
    %v154 = vpop.f32.mrf.mxu0
    %v155 = vadd.f32 %v109, %v154
    %156 = vmatmul.f32.gmra.mxu0 %v129
    %v157 = vpop.f32.mrf.mxu0
    %v158 = vadd.f32 %v114, %v157
    %159 = vmatmul.f32.gmra.mxu0 %v132
    %v160 = vpop.f32.mrf.mxu0
    %v161 = vadd.f32 %v119, %v160
    %162 = vdwg.mxu0
    %v163 = vmax.f32 %v152, 0.0
    %v164 = vmax.f32 %v155, 0.0
    %v165 = vmax.f32 %v158, 0.0
    %v166 = vmax.f32 %v161, 0.0
    %s167 = scalar_lea.vmem %s3, 32
    %v168 = vld [vmem:[%s167] sm:$0xff]
    %v169 = vld [vmem:[%s167 + $0x8] sm:$0xff]
    %v170 = vld [vmem:[%s167 + $0x10] sm:$0xff]
    %v171 = vld [vmem:[%s167 + $0x18] sm:$0xff]
    %s172 = scalar_lea.vmem %s4, 32
    %v173 = vld [vmem:[%s172] sm:$0xff]
    %v174 = vld [vmem:[%s172 + $0x8] sm:$0xff]
    %v175 = vld [vmem:[%s172 + $0x10] sm:$0xff]
    %v176 = vld [vmem:[%s172 + $0x18] sm:$0xff]
    %178 = vset.pattern.permute.xlu0 0
    %179 = vperm.xlu0 %178, %v173
    %v180 = vpop.permute.xlu0 %179
    %183 = vset.pattern.permute.xlu0 0
    %184 = vperm.xlu0 %183, %v174
    %v185 = vpop.permute.xlu0 %184
    %188 = vset.pattern.permute.xlu0 0
    %189 = vperm.xlu0 %188, %v175
    %v190 = vpop.permute.xlu0 %189
    %193 = vset.pattern.permute.xlu0 0
    %194 = vperm.xlu0 %193, %v176
    %v195 = vpop.permute.xlu0 %194
    %v198 = vsel %vm121, %v168, 0
    %v201 = vsel %vm121, %v169, 0
    %v204 = vsel %vm121, %v170, 0
    %v207 = vsel %vm121, %v171, 0
    %209 = vmatpush.msra.mxu0 0.0
    %210 = vmatpush.msra.mxu0 0.0
    %211 = vmatpush.msra.mxu0 0.0
    %212 = vmatpush.msra.mxu0 0.0
    %213 = vmatpush.msra.mxu0 0.0
    %214 = vmatpush.msra.mxu0 0.0
    %215 = vmatpush.msra.mxu0 0.0
    %216 = vmatpush.msra.mxu0 0.0
    %217 = vmatpush.msra.mxu0 0.0
    %218 = vmatpush.msra.mxu0 0.0
    %219 = vmatpush.msra.mxu0 0.0
    %220 = vmatpush.msra.mxu0 0.0
    %221 = vmatpush.msra.mxu0 %v166
    %222 = vmatpush.msra.mxu0 %v165
    %223 = vmatpush.msra.mxu0 %v164
    %224 = vmatpush.msra.mxu0 %v163
    %225 = vmatmul.f32.gmra.mxu0 %v198
    %v226 = vpop.f32.mrf.mxu0
    %v227 = vadd.f32 %v180, %v226
    %228 = vmatmul.f32.gmra.mxu0 %v201
    %v229 = vpop.f32.mrf.mxu0
    %v230 = vadd.f32 %v185, %v229
    %231 = vmatmul.f32.gmra.mxu0 %v204
    %v232 = vpop.f32.mrf.mxu0
    %v233 = vadd.f32 %v190, %v232
    %234 = vmatmul.f32.gmra.mxu0 %v207
    %v235 = vpop.f32.mrf.mxu0
    %v236 = vadd.f32 %v195, %v235
    %237 = vdwg.mxu0
    %v238 = vmax.f32 %v227, 0.0
    %v239 = vmax.f32 %v230, 0.0
    %v240 = vmax.f32 %v233, 0.0
    %v241 = vmax.f32 %v236, 0.0
    %v242 = vld [vmem:[%s5] sm:$0xff]
    %v243 = vld [vmem:[%s5 + $0x8] sm:$0xff]
    %v244 = vld [vmem:[%s5 + $0x10] sm:$0xff]
    %v245 = vld [vmem:[%s5 + $0x18] sm:$0xff]
    %247 = vset.pattern.permute.xlu0 0
    %248 = vperm.xlu0 %247, %v242
    %v249 = vpop.permute.xlu0 %248
    %252 = vset.pattern.permute.xlu0 0
    %253 = vperm.xlu0 %252, %v243
    %v254 = vpop.permute.xlu0 %253
    %257 = vset.pattern.permute.xlu0 0
    %258 = vperm.xlu0 %257, %v244
    %v259 = vpop.permute.xlu0 %258
    %262 = vset.pattern.permute.xlu0 0
    %263 = vperm.xlu0 %262, %v245
    %v264 = vpop.permute.xlu0 %263
    %v266 = vmul.f32 %v238, %v249
    %v267 = vmul.f32 %v239, %v254
    %v268 = vmul.f32 %v240, %v259
    %v269 = vmul.f32 %v241, %v264
    %v270 = vadd.f32 %v266, %v267
    %v271 = vadd.f32 %v270, %v268
    %v272 = vadd.f32 %v271, %v269
    %v273 = vrot.slane %v272, 4
    %v274 = vadd.f32 %v272, %v273
    %v275 = vrot.slane %v274, 2
    %v276 = vadd.f32 %v274, %v275
    %v277 = vrot.slane %v276, 1
    %v278 = vadd.f32 %v276, %v277
    %v279 = vld [vmem:[#allocation2] sm:$0x1]
    %281 = vset.pattern.permute.xlu0 0
    %282 = vperm.xlu0 %281, %v279
    %v283 = vpop.permute.xlu0 %282
    %v285 = vperm.slane %v283, 0
    %v286 = vadd.f32 %v278, %v285
    %287 = vst [vmem:[#allocation3] sm:$0x1] %v286
    // Predicated region
    $region30: #{tpu_custom_call.1} parent=1 // pred_check
      _
    $region31: #{tpu_custom_call.1} parent=1 // pred_check_branch
      %289 = sbr.rel (0) target = $region33
    $region32: #{tpu_custom_call.1} parent=1 // pred_region
      %291 = vsyncadd [#allocation4], 0
      %s293 = sshll.u32 [#allocation3], 4
      %s294 = int_to_ptr.vmem [resolvable:$true] %s293
      %s295 = sshll.u32 %s7, 4
      %s296 = int_to_ptr.hbm [resolvable:$true] %s295
      %298 = dma.vmem_to_hbm [thread:$0]  %s294, 16, %s296, [#allocation4]
    $region33: #{tpu_custom_call.1} parent=1 // pred_fallthru
      _
    // Predicated region
    $region34: #{tpu_custom_call.1} parent=1 // pred_check
      _
    $region35: #{tpu_custom_call.1} parent=1 // pred_check_branch
      %300 = sbr.rel (0) target = $region37
    $region36: #{tpu_custom_call.1} parent=1 // pred_region
      %302 = dma.done [#allocation4], 16
    $region37: #{tpu_custom_call.1} parent=1 // pred_fallthru
      _
    %303 = vsyncpa [#allocation4], 1

</llo_original>
